<compile_context>
chip_gen: v7x
topology: tpu7x:2x2x1
jax: 0.10.0
libtpu: 0.0.40
codegen_flags: <defaults>
</compile_context>

<pallas_src>
import functools
import math

import jax
import jax.numpy as jnp
from jax.experimental import pallas as pl
from jax.experimental.pallas import tpu as pltpu


def _supcon_kernel(a_ref, c_ref, la_ref, lc_ref, pos_ref, out_ref,
                   m_sc, l_sc, smz_sc, *,
                   temperature, na_real, nc_real, nc_pad,
                   has_row_pad, has_col_pad, static_max):
    i = pl.program_id(0)            # anchor-row tile index ("parallel")
    k = pl.program_id(1)            # contrast-column tile index (reduction)
    nk = pl.num_programs(1)
    tna = a_ref.shape[0]
    tnc = c_ref.shape[0]
    row0 = i * tna                  # global row offset of this tile
    col0 = k * tnc                  # global col offset of this tile

    @pl.when(k == 0)
    def _init():
        if static_max is None:
            m_sc[...] = jnp.full_like(m_sc, -jnp.inf)
        l_sc[...] = jnp.zeros_like(l_sc)
        smz_sc[...] = jnp.zeros_like(smz_sc)

    # z = (A / T) @ C^T : the 1/temperature scale was pre-applied (in f32) to the
    # anchor features in the wrapper, so it is not redone on every k step.
    z = jax.lax.dot_general(a_ref[...], c_ref[...], (((1,), (1,)), ((), ())),
                            preferred_element_type=jnp.float32)   # [tna,tnc] f32

    # Positive-pair mask rebuilt in-kernel from the tiny label vectors.
    # (Padded contrast columns carry an int32 sentinel label and never match;
    #  their z is exactly 0 anyway, so they cannot touch the numerator.)
    la = la_ref[...]                                  # [tna, 3] int32
    lc = lc_ref[...]                                  # [3, tnc] int32
    same = ((la[:, 0:1] == lc[0:1, :]).astype(jnp.float32)
            + (la[:, 1:2] == lc[1:2, :]).astype(jnp.float32)
            + (la[:, 2:3] == lc[2:3, :]).astype(jnp.float32))
    mask_t = same * jnp.float32(1.0 / 3.0)            # [tna, tnc]

    # Positive-pair numerator FIRST (before the exp block) so z / mask_t vregs
    # can be reused by the softmax temporaries.
    smz_sc[...] += jnp.sum(mask_t * z, axis=1, keepdims=True)

    # Online logsumexp over ALL columns of this tile; self / pad columns are
    # corrected below, only on the (few) tiles that actually contain them.
    if static_max is None:
        m_prev = m_sc[...]
        m_new = jnp.maximum(m_prev, jnp.max(z, axis=1, keepdims=True))
        alpha = jnp.exp(m_prev - m_new)
        p = jnp.exp(z - m_new)                        # EUP-bound hot op
        l_sc[...] = alpha * l_sc[...] + jnp.sum(p, axis=1, keepdims=True)
        m_sc[...] = m_new
    else:
        # normalized-feature fast path: logits are bounded by 1/T, skip the
        # running max and the alpha rescale chain entirely.
        p = jnp.exp(z - jnp.float32(static_max))
        l_sc[...] += jnp.sum(p, axis=1, keepdims=True)

    # ---- self-contrast removal: only tiles intersecting the diagonal band ----
    diag_off = row0 - col0          # local diag column = local row + diag_off
    has_diag = jnp.logical_and(diag_off > -tnc, diag_off < tna)

    @pl.when(has_diag)
    def _remove_self():
        r_io = jax.lax.broadcasted_iota(jnp.int32, (tna, tnc), 0)
        c_io = jax.lax.broadcasted_iota(jnp.int32, (tna, tnc), 1)
        is_diag = (c_io - r_io) == diag_off
        # per-row diagonal logit (0 where this row's diag column is not in tile)
        z_diag = jnp.sum(jnp.where(is_diag, z, 0.0), axis=1, keepdims=True)
        row_g = jax.lax.broadcasted_iota(jnp.int32, (tna, 1), 0) + row0
        row_has = jnp.logical_and(row_g >= col0, row_g < col0 + tnc)
        m_cur = m_sc[...] if static_max is None else jnp.float32(static_max)
        l_sc[...] -= jnp.where(row_has, jnp.exp(z_diag - m_cur), 0.0)
        # the self pair matches all three labels -> its mask value is exactly 1.0
        smz_sc[...] -= jnp.where(row_has, z_diag, 0.0)

    # ---- zero-padded contrast columns (their z == 0): last k tile only ----
    if has_col_pad:
        n_pad = nc_pad - nc_real    # static

        @pl.when(k == nk - 1)
        def _remove_pad_cols():
            if static_max is None:
                l_sc[...] -= jnp.float32(n_pad) * jnp.exp(0.0 - m_sc[...])
            else:
                l_sc[...] -= jnp.float32(n_pad * math.exp(-float(static_max)))

    @pl.when(k == nk - 1)
    def _finalize():
        if static_max is None:
            log_z = m_sc[...] + jnp.log(l_sc[...])                # [tna, 1]
        else:
            log_z = jnp.float32(static_max) + jnp.log(l_sc[...])
        # TODO(synk): rows with zero positives divide by zero -> NaN, exactly
        # matching the torch reference's behaviour.
        mean_lpp = smz_sc[...] / pos_ref[...] - log_z
        loss_rows = mean_lpp * jnp.float32(-temperature)          # [tna, 1]
        if has_row_pad:
            rvalid = (jax.lax.broadcasted_iota(jnp.int32, (tna, 1), 0)
                      + row0) < na_real
            loss_rows = jnp.where(rvalid, loss_rows, 0.0)
        out_ref[...] = loss_rows


def _round_up(x, m):
    return ((x + m - 1) // m) * m


def _device_kind():
    try:
        return jax.devices()[0].device_kind.lower()
    except Exception:  # pragma: no cover - defensive
        return ""


def _chip_defaults(kind):
    """(tile_na, tile_nc, vmem_limit_bytes, two_tensorcores) per TPU generation."""
    if "v6" in kind:          # v6e: 128 MiB physical VMEM -> big tiles, raise limit
        return 512, 1024, 96 * 1024 * 1024, False
    if "v7" in kind:          # v7x: 64 MiB VMEM per TC, 2 TCs -> tighter budget
        return 256, 1024, 48 * 1024 * 1024, True
    if "v5e" in kind or "v5 lite" in kind or "v5lite" in kind:
        return 256, 512, 64 * 1024 * 1024, False   # v5e default scoped is 16 MiB
    return 256, 512, None, False


def supcon_loss(features, labels_1=None, labels_2=None, labels_3=None,
                mask=None, temperature=0.2, contrast_mode='all',
                tile_na=None, tile_nc=None, mxu_dtype=jnp.bfloat16,
                features_normalized=False, vmem_limit_bytes=None):
    """JAX/Pallas equivalent of SupConLoss.forward. Returns a scalar.

    mxu_dtype: dtype fed to the MXU (default bf16 -> half the HBM traffic and
      the native bf16 MXU path; pass jnp.float32 for bit-faithful logits, or
      None to keep the input dtype).  All in-kernel elementwise math is f32.
    features_normalized: if True, logits are bounded by 1/temperature and the
      online running max is skipped (shorter dependency chain into the exp).
    """
    if features.ndim < 3:
        raise ValueError('`features` needs to be [bsz, n_views, ...]')
    if features.ndim > 3:
        features = features.reshape(features.shape[0], features.shape[1], -1)
    bsz, n_views, dim = features.shape

    if labels_1 is not None and mask is not None:
        raise ValueError('Cannot define both `labels` and `mask`')
    elif labels_1 is None and mask is None:
        # SimCLR / identity mask: every sample is its own class.
        l1 = l2 = l3 = jnp.arange(bsz, dtype=jnp.int32)
    elif labels_1 is not None:
        l1 = labels_1.reshape(-1).astype(jnp.int32)
        if l1.shape[0] != bsz:
            raise ValueError('Num of labels does not match num of features')
        l2 = labels_2.reshape(-1).astype(jnp.int32)
        l3 = labels_3.reshape(-1).astype(jnp.int32)
    else:
        # TODO(synk): arbitrary pairwise `mask` input is not routed through the
        # Pallas kernel (only label-derived / identity masks are rebuilt
        # in-kernel to avoid streaming an [Na, Nc] mask from HBM).
        raise NotImplementedError('explicit `mask` input not supported')

    # contrast_feature = torch.cat(torch.unbind(features, dim=1), dim=0)
    contrast_feature = jnp.transpose(features, (1, 0, 2)).reshape(
        n_views * bsz, dim)

    if contrast_mode == 'one':
        anchor_feature = features[:, 0, :]
        anchor_count = 1
    elif contrast_mode == 'all':
        anchor_feature = contrast_feature
        anchor_count = n_views
    else:
        raise ValueError('Unknown mode: {}'.format(contrast_mode))

    na = anchor_count * bsz
    nc = n_views * bsz

    mxu_dtype = jnp.dtype(mxu_dtype if mxu_dtype is not None else features.dtype)

    # Hoisted 1/T scale: applied once, in f32, to the (small) anchor operand,
    # then cast.  The contrast operand is only cast.
    anchor_scaled = (anchor_feature.astype(jnp.float32)
                     * jnp.float32(1.0 / temperature)).astype(mxu_dtype)
    contrast_mxu = contrast_feature.astype(mxu_dtype)

    # Labels replicated per view (view-major order: global index g <-> g % bsz).
    la = jnp.stack([jnp.tile(l1, anchor_count),
                    jnp.tile(l2, anchor_count),
                    jnp.tile(l3, anchor_count)], axis=1)          # [na, 3]
    lc = jnp.stack([jnp.tile(l1, n_views),
                    jnp.tile(l2, n_views),
                    jnp.tile(l3, n_views)], axis=0)               # [3, nc]

    # Positives per anchor row (self removed), precomputed from the bsz x bsz
    # label mask in the wrapper (O(bsz^2) XLA, vs O(na*nc) per-step in-kernel).
    eq_b = ((l1[:, None] == l1[None, :]).astype(jnp.float32)
            + (l2[:, None] == l2[None, :]).astype(jnp.float32)
            + (l3[:, None] == l3[None, :]).astype(jnp.float32)) * (1.0 / 3.0)
    pos_b = jnp.float32(n_views) * jnp.sum(eq_b, axis=1) - 1.0
    pos = jnp.tile(pos_b, anchor_count).reshape(na, 1)

    # Per-chip tile / VMEM defaults.
    kind = _device_kind()
    d_tna, d_tnc, d_vmem, two_cores = _chip_defaults(kind)
    tile_na = d_tna if tile_na is None else tile_na
    tile_nc = d_tnc if tile_nc is None else tile_nc
    vmem_limit_bytes = d_vmem if vmem_limit_bytes is None else vmem_limit_bytes

    tna = _round_up(min(int(tile_na), _round_up(na, 8)), 8)
    tnc = _round_up(min(int(tile_nc), _round_up(nc, 128)), 128)

    # v7x: both TensorCores split the "parallel" anchor axis -> prefer an even
    # (>= 2) number of anchor tiles so neither core idles.
    if two_cores and na > 8:
        n_i = -(-na // tna)
        if n_i % 2 == 1:
            tna2 = _round_up(-(-na // (n_i + 1)), 8)
            if 8 <= tna2 <= tna and (-(-na // tna2)) % 2 == 0:
                tna = tna2

    na_pad = _round_up(na, tna)
    nc_pad = _round_up(nc, tnc)

    sentinel = jnp.iinfo(jnp.int32).min
    anchor_p = jnp.pad(anchor_scaled, ((0, na_pad - na), (0, 0)))
    contrast_p = jnp.pad(contrast_mxu, ((0, nc_pad - nc), (0, 0)))
    la_p = jnp.pad(la, ((0, na_pad - na), (0, 0)), constant_values=sentinel + 1)
    lc_p = jnp.pad(lc, ((0, 0), (0, nc_pad - nc)), constant_values=sentinel)
    pos_p = jnp.pad(pos, ((0, na_pad - na), (0, 0)), constant_values=1.0)

    grid = (na_pad // tna, nc_pad // tnc)
    static_max = (1.0 / float(temperature)) if features_normalized else None

    kernel = functools.partial(
        _supcon_kernel,
        temperature=float(temperature),
        na_real=na, nc_real=nc, nc_pad=nc_pad,
        has_row_pad=(na_pad != na), has_col_pad=(nc_pad != nc),
        static_max=static_max)

    itemsize = jnp.dtype(mxu_dtype).itemsize
    cost = pl.CostEstimate(
        flops=2 * na * nc * dim,
        transcendentals=na * nc,
        bytes_accessed=int((na_pad // tna) * nc_pad * dim * itemsize
                           + na_pad * dim * itemsize + na_pad * 4))

    comp_kwargs = dict(dimension_semantics=("parallel", "arbitrary"))
    if vmem_limit_bytes is not None:
        comp_kwargs["vmem_limit_bytes"] = int(vmem_limit_bytes)

    per_row_loss = pl.pallas_call(
        kernel,
        out_shape=jax.ShapeDtypeStruct((na_pad, 1), jnp.float32),
        grid_spec=pltpu.PrefetchScalarGridSpec(
            num_scalar_prefetch=0,
            grid=grid,
            in_specs=[
                pl.BlockSpec((tna, dim), lambda i, k: (i, 0)),   # anchor tile
                pl.BlockSpec((tnc, dim), lambda i, k: (k, 0)),   # contrast tile
                pl.BlockSpec((tna, 3), lambda i, k: (i, 0)),     # anchor labels
                pl.BlockSpec((3, tnc), lambda i, k: (0, k)),     # contrast labels
                pl.BlockSpec((tna, 1), lambda i, k: (i, 0)),     # positives/row
            ],
            out_specs=pl.BlockSpec((tna, 1), lambda i, k: (i, 0)),
            scratch_shapes=[pltpu.VMEM((tna, 1), jnp.float32)] * 3,
        ),
        compiler_params=pltpu.CompilerParams(**comp_kwargs),
        cost_estimate=cost,
    )(anchor_p, contrast_p, la_p, lc_p, pos_p)

    # loss.view(anchor_count, batch_size).mean() == mean over all `na` anchors.
    return jnp.sum(per_row_loss) / na


def _supcon_loss_ref(features, labels_1, labels_2, labels_3, temperature=0.2):
    """Pure-JAX reference replicating the torch forward (contrast_mode='all')."""
    bsz, n_views, _ = features.shape
    l1 = labels_1.reshape(-1, 1)
    l2 = labels_2.reshape(-1, 1)
    l3 = labels_3.reshape(-1, 1)
    mask = ((l1 == l1.T).astype(jnp.float32)
            + (l2 == l2.T).astype(jnp.float32)
            + (l3 == l3.T).astype(jnp.float32)) / 3.0
    cf = jnp.concatenate([features[:, v, :] for v in range(n_views)], axis=0)
    adc = (cf @ cf.T) / temperature
    logits = adc - jnp.max(adc, axis=1, keepdims=True)
    n = cf.shape[0]
    mask = jnp.tile(mask, (n_views, n_views))
    logits_mask = 1.0 - jnp.eye(n, dtype=jnp.float32)
    mask = mask * logits_mask
    exp_logits = jnp.exp(logits) * logits_mask
    log_prob = logits - jnp.log(jnp.sum(exp_logits, axis=1, keepdims=True))
    mean_log_prob_pos = jnp.sum(mask * log_prob, axis=1) / jnp.sum(mask, axis=1)
    loss = -temperature * mean_log_prob_pos
    return jnp.mean(loss)


if __name__ == "__main__":
    key = jax.random.PRNGKey(0)
    k_feat, k_l1, k_l2, k_l3 = jax.random.split(key, 4)

    bsz, n_views, dim = 8, 2, 32
    feats = jax.random.normal(k_feat, (bsz, n_views, dim), dtype=jnp.float32)
    # L2-normalize like a typical projection head output
    feats = feats / jnp.linalg.norm(feats, axis=-1, keepdims=True)

    labels_1 = jax.random.randint(k_l1, (bsz,), 0, 3)
    labels_2 = jax.random.randint(k_l2, (bsz,), 0, 2)
    labels_3 = jax.random.randint(k_l3, (bsz,), 0, 4)

    ref = _supcon_loss_ref(feats, labels_1, labels_2, labels_3, temperature=0.2)

    # Exact path: f32 MXU operands, online running max.
    loss_f32 = jax.block_until_ready(
        supcon_loss(feats, labels_1, labels_2, labels_3, temperature=0.2,
                    mxu_dtype=jnp.float32))
    assert jnp.allclose(loss_f32, ref, atol=1e-4, rtol=1e-4), (loss_f32, ref)

    # Normalized-features fast path: static logit bound, no online max.
    loss_norm = jax.block_until_ready(
        supcon_loss(feats, labels_1, labels_2, labels_3, temperature=0.2,
                    mxu_dtype=jnp.float32, features_normalized=True))
    assert jnp.allclose(loss_norm, ref, atol=1e-4, rtol=1e-4), (loss_norm, ref)

    # Default production path: bf16 MXU operands.
    loss_bf16 = jax.block_until_ready(
        supcon_loss(feats, labels_1, labels_2, labels_3, temperature=0.2))
    assert bool(jnp.isfinite(loss_bf16))
    assert jnp.allclose(loss_bf16, ref, atol=5e-2, rtol=5e-2), (loss_bf16, ref)

    # SimCLR / identity-mask path (no labels).
    ref_simclr = _supcon_loss_ref(feats, jnp.arange(bsz), jnp.arange(bsz),
                                  jnp.arange(bsz), temperature=0.2)
    loss_simclr = jax.block_until_ready(
        supcon_loss(feats, temperature=0.2, mxu_dtype=jnp.float32))
    assert jnp.allclose(loss_simclr, ref_simclr, atol=1e-4, rtol=1e-4), (
        loss_simclr, ref_simclr)

    print("KERNEL_OK")
</pallas_src>

<mosaic_0001>
module attributes {stable_mosaic.version = 11 : i64} {
  func.func @_supcon_kernel(%arg0: i32, %arg1: i32, %arg2: memref<16x32xf32, #tpu.memory_space<vmem>>, %arg3: memref<128x32xf32, #tpu.memory_space<vmem>>, %arg4: memref<16x3xi32, #tpu.memory_space<vmem>>, %arg5: memref<3x128xi32, #tpu.memory_space<vmem>>, %arg6: memref<16x1xf32, #tpu.memory_space<vmem>>, %arg7: memref<16x1xf32, #tpu.memory_space<vmem>>, %arg8: memref<16x1xf32, #tpu.memory_space<vmem>>, %arg9: memref<16x1xf32, #tpu.memory_space<vmem>>, %arg10: memref<16x1xf32, #tpu.memory_space<vmem>>) attributes {dimension_semantics = [#tpu.dimension_semantics<parallel>, #tpu.dimension_semantics<arbitrary>], iteration_bounds = array<i64: 1, 1>, scalar_prefetch = 0 : i64, scratch_operands = 3 : i64, tpu.core_type = #tpu.core_type<tc>, window_params = [{transform_indices = @transform_0, window_bounds = array<i64: 16, 32>}, {transform_indices = @transform_1, window_bounds = array<i64: 128, 32>}, {transform_indices = @transform_2, window_bounds = array<i64: 16, 3>}, {transform_indices = @transform_3, window_bounds = array<i64: 3, 128>}, {transform_indices = @transform_4, window_bounds = array<i64: 16, 1>}, {transform_indices = @transform_5, window_bounds = array<i64: 16, 1>}]} {
    %c16_i32 = arith.constant 16 : i32
    %0 = arith.muli %arg0, %c16_i32 : i32
    %c128_i32 = arith.constant 128 : i32
    %1 = arith.muli %arg1, %c128_i32 : i32
    %c0_i32 = arith.constant 0 : i32
    %2 = arith.cmpi eq, %arg1, %c0_i32 : i32
    %3 = arith.extui %2 : i1 to i32
    %c0_i32_0 = arith.constant 0 : i32
    %4 = arith.cmpi ne, %3, %c0_i32_0 : i32
    scf.if %4 {
      %cst_30 = arith.constant 0xFF800000 : f32
      %69 = vector.broadcast %cst_30 : f32 to vector<16x1xf32>
      %c0_31 = arith.constant 0 : index
      %c0_32 = arith.constant 0 : index
      %70 = vector.load %arg8[%c0_31, %c0_32] : memref<16x1xf32, #tpu.memory_space<vmem>>, vector<16x1xf32>
      tpu.vector_store %arg8[%c0_31, %c0_32], %69 {strides = array<i32>} : memref<16x1xf32, #tpu.memory_space<vmem>>, vector<16x1xf32>,
      %cst_33 = arith.constant 0.000000e+00 : f32
      %71 = vector.broadcast %cst_33 : f32 to vector<16x1xf32>
      %c0_34 = arith.constant 0 : index
      %c0_35 = arith.constant 0 : index
      %72 = vector.load %arg9[%c0_34, %c0_35] : memref<16x1xf32, #tpu.memory_space<vmem>>, vector<16x1xf32>
      tpu.vector_store %arg9[%c0_34, %c0_35], %71 {strides = array<i32>} : memref<16x1xf32, #tpu.memory_space<vmem>>, vector<16x1xf32>,
      %cst_36 = arith.constant 0.000000e+00 : f32
      %73 = vector.broadcast %cst_36 : f32 to vector<16x1xf32>
      %c0_37 = arith.constant 0 : index
      %c0_38 = arith.constant 0 : index
      %74 = vector.load %arg10[%c0_37, %c0_38] : memref<16x1xf32, #tpu.memory_space<vmem>>, vector<16x1xf32>
      tpu.vector_store %arg10[%c0_37, %c0_38], %73 {strides = array<i32>} : memref<16x1xf32, #tpu.memory_space<vmem>>, vector<16x1xf32>,
    } else {
    }
    %c0 = arith.constant 0 : index
    %c0_1 = arith.constant 0 : index
    %5 = vector.load %arg2[%c0, %c0_1] : memref<16x32xf32, #tpu.memory_space<vmem>>, vector<16x32xf32>
    %c0_2 = arith.constant 0 : index
    %c0_3 = arith.constant 0 : index
    %6 = vector.load %arg3[%c0_2, %c0_3] : memref<128x32xf32, #tpu.memory_space<vmem>>, vector<128x32xf32>
    %cst = arith.constant dense<0.000000e+00> : vector<16x128xf32>
    %7 = tpu.matmul %5, %6, %cst {dimension_numbers = #tpu.dot_dimension_numbers<[1], [1], [0], [0], [0, 0, 1, 0], [], []>} : vector<16x32xf32>, vector<128x32xf32>, vector<16x128xf32> -> vector<16x128xf32>
    %c0_4 = arith.constant 0 : index
    %c0_5 = arith.constant 0 : index
    %8 = vector.load %arg4[%c0_4, %c0_5] : memref<16x3xi32, #tpu.memory_space<vmem>>, vector<16x3xi32>
    %c0_6 = arith.constant 0 : index
    %c0_7 = arith.constant 0 : index
    %9 = vector.load %arg5[%c0_6, %c0_7] : memref<3x128xi32, #tpu.memory_space<vmem>>, vector<3x128xi32>
    %10 = vector.extract_strided_slice %8 {offsets = [0, 0], sizes = [16, 1], strides = [1, 1]} : vector<16x3xi32> to vector<16x1xi32>
    %11 = vector.extract_strided_slice %9 {offsets = [0, 0], sizes = [1, 128], strides = [1, 1]} : vector<3x128xi32> to vector<1x128xi32>
    %12 = vector.broadcast %10 : vector<16x1xi32> to vector<16x128xi32>
    %13 = vector.broadcast %11 : vector<1x128xi32> to vector<16x128xi32>
    %14 = arith.cmpi eq, %12, %13 : vector<16x128xi32>
    %15 = arith.extui %14 : vector<16x128xi1> to vector<16x128xi32>
    %16 = arith.sitofp %15 : vector<16x128xi32> to vector<16x128xf32>
    %17 = vector.extract_strided_slice %8 {offsets = [0, 1], sizes = [16, 1], strides = [1, 1]} : vector<16x3xi32> to vector<16x1xi32>
    %18 = vector.extract_strided_slice %9 {offsets = [1, 0], sizes = [1, 128], strides = [1, 1]} : vector<3x128xi32> to vector<1x128xi32>
    %19 = vector.broadcast %17 : vector<16x1xi32> to vector<16x128xi32>
    %20 = vector.broadcast %18 : vector<1x128xi32> to vector<16x128xi32>
    %21 = arith.cmpi eq, %19, %20 : vector<16x128xi32>
    %22 = arith.extui %21 : vector<16x128xi1> to vector<16x128xi32>
    %23 = arith.sitofp %22 : vector<16x128xi32> to vector<16x128xf32>
    %24 = arith.addf %16, %23 : vector<16x128xf32>
    %25 = vector.extract_strided_slice %8 {offsets = [0, 2], sizes = [16, 1], strides = [1, 1]} : vector<16x3xi32> to vector<16x1xi32>
    %26 = vector.extract_strided_slice %9 {offsets = [2, 0], sizes = [1, 128], strides = [1, 1]} : vector<3x128xi32> to vector<1x128xi32>
    %27 = vector.broadcast %25 : vector<16x1xi32> to vector<16x128xi32>
    %28 = vector.broadcast %26 : vector<1x128xi32> to vector<16x128xi32>
    %29 = arith.cmpi eq, %27, %28 : vector<16x128xi32>
    %30 = arith.extui %29 : vector<16x128xi1> to vector<16x128xi32>
    %31 = arith.sitofp %30 : vector<16x128xi32> to vector<16x128xf32>
    %32 = arith.addf %24, %31 : vector<16x128xf32>
    %cst_8 = arith.constant 0.333333343 : f32
    %33 = vector.broadcast %cst_8 : f32 to vector<16x128xf32>
    %34 = arith.mulf %32, %33 : vector<16x128xf32>
    %c0_9 = arith.constant 0 : index
    %c0_10 = arith.constant 0 : index
    %35 = vector.load %arg10[%c0_9, %c0_10] : memref<16x1xf32, #tpu.memory_space<vmem>>, vector<16x1xf32>
    %36 = arith.mulf %34, %7 : vector<16x128xf32>
    %cst_11 = arith.constant dense<0.000000e+00> : vector<16xf32>
    %37 = vector.multi_reduction <add>, %36, %cst_11 [1] : vector<16x128xf32> to vector<16xf32>
    %38 = vector.shape_cast %37 : vector<16xf32> to vector<16x1xf32>
    %39 = arith.addf %35, %38 : vector<16x1xf32>
    %c0_12 = arith.constant 0 : index
    %c0_13 = arith.constant 0 : index
    %40 = vector.load %arg10[%c0_12, %c0_13] : memref<16x1xf32, #tpu.memory_space<vmem>>, vector<16x1xf32>
    tpu.vector_store %arg10[%c0_12, %c0_13], %39 {strides = array<i32>} : memref<16x1xf32, #tpu.memory_space<vmem>>, vector<16x1xf32>,
    %c0_14 = arith.constant 0 : index
    %c0_15 = arith.constant 0 : index
    %41 = vector.load %arg8[%c0_14, %c0_15] : memref<16x1xf32, #tpu.memory_space<vmem>>, vector<16x1xf32>
    %cst_16 = arith.constant dense<0xFF800000> : vector<16xf32>
    %42 = vector.multi_reduction <maximumf>, %7, %cst_16 [1] : vector<16x128xf32> to vector<16xf32>
    %43 = vector.shape_cast %42 : vector<16xf32> to vector<16x1xf32>
    %44 = arith.maximumf %41, %43 : vector<16x1xf32>
    %45 = arith.subf %41, %44 : vector<16x1xf32>
    %46 = math.exp %45 : vector<16x1xf32>
    %47 = vector.broadcast %44 : vector<16x1xf32> to vector<16x128xf32>
    %48 = arith.subf %7, %47 : vector<16x128xf32>
    %49 = math.exp %48 : vector<16x128xf32>
    %c0_17 = arith.constant 0 : index
    %c0_18 = arith.constant 0 : index
    %50 = vector.load %arg9[%c0_17, %c0_18] : memref<16x1xf32, #tpu.memory_space<vmem>>, vector<16x1xf32>
    %51 = arith.mulf %46, %50 : vector<16x1xf32>
    %cst_19 = arith.constant dense<0.000000e+00> : vector<16xf32>
    %52 = vector.multi_reduction <add>, %49, %cst_19 [1] : vector<16x128xf32> to vector<16xf32>
    %53 = vector.shape_cast %52 : vector<16xf32> to vector<16x1xf32>
    %54 = arith.addf %51, %53 : vector<16x1xf32>
    %c0_20 = arith.constant 0 : index
    %c0_21 = arith.constant 0 : index
    %55 = vector.load %arg9[%c0_20, %c0_21] : memref<16x1xf32, #tpu.memory_space<vmem>>, vector<16x1xf32>
    tpu.vector_store %arg9[%c0_20, %c0_21], %54 {strides = array<i32>} : memref<16x1xf32, #tpu.memory_space<vmem>>, vector<16x1xf32>,
    %c0_22 = arith.constant 0 : index
    %c0_23 = arith.constant 0 : index
    %56 = vector.load %arg8[%c0_22, %c0_23] : memref<16x1xf32, #tpu.memory_space<vmem>>, vector<16x1xf32>
    tpu.vector_store %arg8[%c0_22, %c0_23], %44 {strides = array<i32>} : memref<16x1xf32, #tpu.memory_space<vmem>>, vector<16x1xf32>,
    %57 = arith.subi %0, %1 : i32
    %c-128_i32 = arith.constant -128 : i32
    %58 = arith.cmpi sgt, %57, %c-128_i32 : i32
    %c16_i32_24 = arith.constant 16 : i32
    %59 = arith.cmpi slt, %57, %c16_i32_24 : i32
    %60 = arith.andi %58, %59 : i1
    %61 = arith.extui %60 : i1 to i32
    %c0_i32_25 = arith.constant 0 : i32
    %62 = arith.cmpi ne, %61, %c0_i32_25 : i32
    scf.if %62 {
      %69 = tpu.iota {dimensions = array<i32: 0>} : vector<16x128xi32>
      %70 = tpu.iota {dimensions = array<i32: 1>} : vector<16x128xi32>
      %71 = arith.subi %70, %69 : vector<16x128xi32>
      %72 = vector.broadcast %57 : i32 to vector<16x128xi32>
      %73 = arith.cmpi eq, %71, %72 : vector<16x128xi32>
      %cst_30 = arith.constant 0.000000e+00 : f32
      %74 = vector.broadcast %cst_30 : f32 to vector<16x128xf32>
      %75 = arith.select %73, %7, %74 : vector<16x128xi1>, vector<16x128xf32>
      %cst_31 = arith.constant dense<0.000000e+00> : vector<16xf32>
      %76 = vector.multi_reduction <add>, %75, %cst_31 [1] : vector<16x128xf32> to vector<16xf32>
      %77 = vector.shape_cast %76 : vector<16xf32> to vector<16x1xf32>
      %78 = tpu.iota {dimensions = array<i32: 0>} : vector<16x1xi32>
      %79 = vector.broadcast %0 : i32 to vector<16x1xi32>
      %80 = arith.addi %78, %79 : vector<16x1xi32>
      %81 = vector.broadcast %1 : i32 to vector<16x1xi32>
      %82 = arith.cmpi sge, %80, %81 : vector<16x1xi32>
      %c128_i32_32 = arith.constant 128 : i32
      %83 = arith.addi %1, %c128_i32_32 : i32
      %84 = vector.broadcast %83 : i32 to vector<16x1xi32>
      %85 = arith.cmpi slt, %80, %84 : vector<16x1xi32>
      %86 = arith.andi %82, %85 : vector<16x1xi1>
      %c0_33 = arith.constant 0 : index
      %c0_34 = arith.constant 0 : index
      %87 = vector.load %arg8[%c0_33, %c0_34] : memref<16x1xf32, #tpu.memory_space<vmem>>, vector<16x1xf32>
      %c0_35 = arith.constant 0 : index
      %c0_36 = arith.constant 0 : index
      %88 = vector.load %arg9[%c0_35, %c0_36] : memref<16x1xf32, #tpu.memory_space<vmem>>, vector<16x1xf32>
      %89 = arith.subf %77, %87 : vector<16x1xf32>
      %90 = math.exp %89 : vector<16x1xf32>
      %cst_37 = arith.constant 0.000000e+00 : f32
      %91 = vector.broadcast %cst_37 : f32 to vector<16x1xf32>
      %92 = arith.select %86, %90, %91 : vector<16x1xi1>, vector<16x1xf32>
      %93 = arith.subf %88, %92 : vector<16x1xf32>
      %c0_38 = arith.constant 0 : index
      %c0_39 = arith.constant 0 : index
      %94 = vector.load %arg9[%c0_38, %c0_39] : memref<16x1xf32, #tpu.memory_space<vmem>>, vector<16x1xf32>
      tpu.vector_store %arg9[%c0_38, %c0_39], %93 {strides = array<i32>} : memref<16x1xf32, #tpu.memory_space<vmem>>, vector<16x1xf32>,
      %c0_40 = arith.constant 0 : index
      %c0_41 = arith.constant 0 : index
      %95 = vector.load %arg10[%c0_40, %c0_41] : memref<16x1xf32, #tpu.memory_space<vmem>>, vector<16x1xf32>
      %cst_42 = arith.constant 0.000000e+00 : f32
      %96 = vector.broadcast %cst_42 : f32 to vector<16x1xf32>
      %97 = arith.select %86, %77, %96 : vector<16x1xi1>, vector<16x1xf32>
      %98 = arith.subf %95, %97 : vector<16x1xf32>
      %c0_43 = arith.constant 0 : index
      %c0_44 = arith.constant 0 : index
      %99 = vector.load %arg10[%c0_43, %c0_44] : memref<16x1xf32, #tpu.memory_space<vmem>>, vector<16x1xf32>
      tpu.vector_store %arg10[%c0_43, %c0_44], %98 {strides = array<i32>} : memref<16x1xf32, #tpu.memory_space<vmem>>, vector<16x1xf32>,
    } else {
    }
    %c0_i32_26 = arith.constant 0 : i32
    %63 = arith.cmpi eq, %arg1, %c0_i32_26 : i32
    %64 = arith.extui %63 : i1 to i32
    %c0_i32_27 = arith.constant 0 : i32
    %65 = arith.cmpi ne, %64, %c0_i32_27 : i32
    scf.if %65 {
      %c0_30 = arith.constant 0 : index
      %c0_31 = arith.constant 0 : index
      %69 = vector.load %arg9[%c0_30, %c0_31] : memref<16x1xf32, #tpu.memory_space<vmem>>, vector<16x1xf32>
      %c0_32 = arith.constant 0 : index
      %c0_33 = arith.constant 0 : index
      %70 = vector.load %arg8[%c0_32, %c0_33] : memref<16x1xf32, #tpu.memory_space<vmem>>, vector<16x1xf32>
      %cst_34 = arith.constant 0.000000e+00 : f32
      %71 = vector.broadcast %cst_34 : f32 to vector<16x1xf32>
      %72 = arith.subf %71, %70 : vector<16x1xf32>
      %73 = math.exp %72 : vector<16x1xf32>
      %cst_35 = arith.constant 1.120000e+02 : f32
      %74 = vector.broadcast %cst_35 : f32 to vector<16x1xf32>
      %75 = arith.mulf %74, %73 : vector<16x1xf32>
      %76 = arith.subf %69, %75 : vector<16x1xf32>
      %c0_36 = arith.constant 0 : index
      %c0_37 = arith.constant 0 : index
      %77 = vector.load %arg9[%c0_36, %c0_37] : memref<16x1xf32, #tpu.memory_space<vmem>>, vector<16x1xf32>
      tpu.vector_store %arg9[%c0_36, %c0_37], %76 {strides = array<i32>} : memref<16x1xf32, #tpu.memory_space<vmem>>, vector<16x1xf32>,
    } else {
    }
    %c0_i32_28 = arith.constant 0 : i32
    %66 = arith.cmpi eq, %arg1, %c0_i32_28 : i32
    %67 = arith.extui %66 : i1 to i32
    %c0_i32_29 = arith.constant 0 : i32
    %68 = arith.cmpi ne, %67, %c0_i32_29 : i32
    scf.if %68 {
      %c0_30 = arith.constant 0 : index
      %c0_31 = arith.constant 0 : index
      %69 = vector.load %arg8[%c0_30, %c0_31] : memref<16x1xf32, #tpu.memory_space<vmem>>, vector<16x1xf32>
      %c0_32 = arith.constant 0 : index
      %c0_33 = arith.constant 0 : index
      %70 = vector.load %arg9[%c0_32, %c0_33] : memref<16x1xf32, #tpu.memory_space<vmem>>, vector<16x1xf32>
      %71 = math.log %70 : vector<16x1xf32>
      %72 = arith.addf %69, %71 : vector<16x1xf32>
      %c0_34 = arith.constant 0 : index
      %c0_35 = arith.constant 0 : index
      %73 = vector.load %arg10[%c0_34, %c0_35] : memref<16x1xf32, #tpu.memory_space<vmem>>, vector<16x1xf32>
      %c0_36 = arith.constant 0 : index
      %c0_37 = arith.constant 0 : index
      %74 = vector.load %arg6[%c0_36, %c0_37] : memref<16x1xf32, #tpu.memory_space<vmem>>, vector<16x1xf32>
      %75 = arith.divf %73, %74 : vector<16x1xf32>
      %76 = arith.subf %75, %72 : vector<16x1xf32>
      %cst_38 = arith.constant -2.000000e-01 : f32
      %77 = vector.broadcast %cst_38 : f32 to vector<16x1xf32>
      %78 = arith.mulf %76, %77 : vector<16x1xf32>
      %c0_39 = arith.constant 0 : index
      %c0_40 = arith.constant 0 : index
      %79 = vector.load %arg7[%c0_39, %c0_40] : memref<16x1xf32, #tpu.memory_space<vmem>>, vector<16x1xf32>
      tpu.vector_store %arg7[%c0_39, %c0_40], %78 {strides = array<i32>} : memref<16x1xf32, #tpu.memory_space<vmem>>, vector<16x1xf32>,
    } else {
    }
    return
  }
  func.func @transform_0(%arg0: i32, %arg1: i32) -> (i32, i32) {
    %c0_i32 = arith.constant 0 : i32
    %c0_i32_0 = arith.constant 0 : i32
    return %arg0, %c0_i32 : i32, i32
  }
  func.func @transform_1(%arg0: i32, %arg1: i32) -> (i32, i32) {
    %c0_i32 = arith.constant 0 : i32
    %c0_i32_0 = arith.constant 0 : i32
    return %arg1, %c0_i32 : i32, i32
  }
  func.func @transform_2(%arg0: i32, %arg1: i32) -> (i32, i32) {
    %c0_i32 = arith.constant 0 : i32
    %c0_i32_0 = arith.constant 0 : i32
    return %arg0, %c0_i32 : i32, i32
  }
  func.func @transform_3(%arg0: i32, %arg1: i32) -> (i32, i32) {
    %c0_i32 = arith.constant 0 : i32
    %c0_i32_0 = arith.constant 0 : i32
    return %c0_i32, %arg1 : i32, i32
  }
  func.func @transform_4(%arg0: i32, %arg1: i32) -> (i32, i32) {
    %c0_i32 = arith.constant 0 : i32
    %c0_i32_0 = arith.constant 0 : i32
    return %arg0, %c0_i32 : i32, i32
  }
  func.func @transform_5(%arg0: i32, %arg1: i32) -> (i32, i32) {
    %c0_i32 = arith.constant 0 : i32
    %c0_i32_0 = arith.constant 0 : i32
    return %arg0, %c0_i32 : i32, i32
  }
}

</mosaic_0001>

<llo_original>
// kernel: tpu_custom_call.1
$region0: #{tpu_custom_call.1}
  #allocation0 [shape = 'u32[]', space=smem, size = 0x4, offset = 0x4, fixed_abs, tag = 'smem constant byte address 0x4 - core index']
  #allocation1 [shape = 'u32[144,128]{1,0:T(1,128)}', space=vmem, size = 0x12000, scoped, tag = 'internal scratch']
  #allocation2 [shape = 'f32[16,1]{1,0:T(8,128)}', space=vmem, size = 0x2000, scoped, tag = 'scratch operand']
  #allocation3 [shape = 'f32[16,1]{1,0:T(8,128)}', space=vmem, size = 0x2000, scoped, tag = 'scratch operand']
  #allocation4 [shape = 'f32[16,1]{1,0:T(8,128)}', space=vmem, size = 0x2000, scoped, tag = 'scratch operand']
  %s0 = inlined_call_operand.vmem [shape: f32[16,32], index: 0, kind: input, shape index: {}]
  %s1 = inlined_call_operand.vmem [shape: f32[128,32], index: 1, kind: input, shape index: {}]
  %s2 = inlined_call_operand.vmem [shape: s32[16,3], index: 2, kind: input, shape index: {}]
  %s3 = inlined_call_operand.vmem [shape: s32[3,128], index: 3, kind: input, shape index: {}]
  %s4 = inlined_call_operand.vmem [shape: f32[16,1], index: 4, kind: input, shape index: {}]
  %s5 = inlined_call_operand.vmem [shape: f32[16,1], index: 5, kind: output, shape index: {}]
  %s6 = sld [smem:[#allocation0]]
  $region42: #{tpu_custom_call.1} parent=0
    _
  %s8 = ssub.s32 1, %s6
  %s9 = scalar_select 0, %s8, %s6
  // Predicated region
  $region2: #{tpu_custom_call.1} parent=0 // pred_check
    _
  $region3: #{tpu_custom_call.1} parent=0 // pred_check_branch
    %11 = sbr.rel (0) target = $region5
  $region4: #{tpu_custom_call.1} parent=0 // pred_region
    _
  $region5: #{tpu_custom_call.1} parent=0 // pred_fallthru
    _
  // Predicated region
  $region6: #{tpu_custom_call.1} parent=0 // pred_check
    _
  $region7: #{tpu_custom_call.1} parent=0 // pred_check_branch
    %13 = sbr.rel (0) target = $region9
  $region8: #{tpu_custom_call.1} parent=0 // pred_region
    _
  $region9: #{tpu_custom_call.1} parent=0 // pred_fallthru
    _
  // Predicated region
  $region10: #{tpu_custom_call.1} parent=0 // pred_check
    _
  $region11: #{tpu_custom_call.1} parent=0 // pred_check_branch
    %15 = sbr.rel (0) target = $region13
  $region12: #{tpu_custom_call.1} parent=0 // pred_region
    _
  $region13: #{tpu_custom_call.1} parent=0 // pred_fallthru
    _
  // Predicated region
  $region14: #{tpu_custom_call.1} parent=0 // pred_check
    _
  $region15: #{tpu_custom_call.1} parent=0 // pred_check_branch
    %17 = sbr.rel (0) target = $region17
  $region16: #{tpu_custom_call.1} parent=0 // pred_region
    _
  $region17: #{tpu_custom_call.1} parent=0 // pred_fallthru
    _
  // Predicated region
  $region18: #{tpu_custom_call.1} parent=0 // pred_check
    _
  $region19: #{tpu_custom_call.1} parent=0 // pred_check_branch
    %19 = sbr.rel (0) target = $region21
  $region20: #{tpu_custom_call.1} parent=0 // pred_region
    _
  $region21: #{tpu_custom_call.1} parent=0 // pred_fallthru
    _
  %s20 = smul.u32 0, 16
  %s21 = smul.u32 0, 128
  %p22 = scmp.eq.s32.totalorder 0, 0
  // Predicated region
  $region22: #{tpu_custom_call.1} parent=0 // pred_check
    %p23 = pneg %p22
  $region23: #{tpu_custom_call.1} parent=0 // pred_check_branch
    %25 = sbr.rel (%p23) target = $region25
  $region24: #{tpu_custom_call.1} parent=0 // pred_region
    %vm26 = vcmask 7168
    %27 = vst.msk [vmem:[#allocation2] sm:$0xff] %vm26, -inf
    %28 = vst.msk [vmem:[#allocation2 + $0x8] sm:$0xff] %vm26, -inf
    %29 = vst.msk [vmem:[#allocation3] sm:$0xff] %vm26, 0.0
    %30 = vst.msk [vmem:[#allocation3 + $0x8] sm:$0xff] %vm26, 0.0
    %31 = vst.msk [vmem:[#allocation4] sm:$0xff] %vm26, 0.0
    %32 = vst.msk [vmem:[#allocation4 + $0x8] sm:$0xff] %vm26, 0.0
  $region25: #{tpu_custom_call.1} parent=0 // pred_fallthru
    _
  %v33 = vld [vmem:[%s0] sm:$0xff]
  %v34 = vld [vmem:[%s0 + $0x8] sm:$0xff]
  %v35 = vld [vmem:[%s1] sm:$0xff]
  %v36 = vld [vmem:[%s1 + $0x8] sm:$0xff]
  %v37 = vld [vmem:[%s1 + $0x10] sm:$0xff]
  %v38 = vld [vmem:[%s1 + $0x18] sm:$0xff]
  %v39 = vld [vmem:[%s1 + $0x20] sm:$0xff]
  %v40 = vld [vmem:[%s1 + $0x28] sm:$0xff]
  %v41 = vld [vmem:[%s1 + $0x30] sm:$0xff]
  %v42 = vld [vmem:[%s1 + $0x38] sm:$0xff]
  %v43 = vld [vmem:[%s1 + $0x40] sm:$0xff]
  %v44 = vld [vmem:[%s1 + $0x48] sm:$0xff]
  %v45 = vld [vmem:[%s1 + $0x50] sm:$0xff]
  %v46 = vld [vmem:[%s1 + $0x58] sm:$0xff]
  %v47 = vld [vmem:[%s1 + $0x60] sm:$0xff]
  %v48 = vld [vmem:[%s1 + $0x68] sm:$0xff]
  %v49 = vld [vmem:[%s1 + $0x70] sm:$0xff]
  %v50 = vld [vmem:[%s1 + $0x78] sm:$0xff]
  %vm51 = vcmask 261120
  %v53 = vsel %vm51, %v33, 0
  %v56 = vsel %vm51, %v34, 0
  %v59 = vsel %vm51, %v35, 0
  %v62 = vsel %vm51, %v36, 0
  %v65 = vsel %vm51, %v37, 0
  %v68 = vsel %vm51, %v38, 0
  %v71 = vsel %vm51, %v39, 0
  %v74 = vsel %vm51, %v40, 0
  %v77 = vsel %vm51, %v41, 0
  %v80 = vsel %vm51, %v42, 0
  %v83 = vsel %vm51, %v43, 0
  %v86 = vsel %vm51, %v44, 0
  %v89 = vsel %vm51, %v45, 0
  %v92 = vsel %vm51, %v46, 0
  %v95 = vsel %vm51, %v47, 0
  %v98 = vsel %vm51, %v48, 0
  %v101 = vsel %vm51, %v49, 0
  %v104 = vsel %vm51, %v50, 0
  %106 = vmatprep.subr.mxu0 0.0
  %107 = vmatpush1.xpose.msra.mxu0 %v59
  %108 = vmatprep.subr.mxu0 0.0
  %109 = vmatpush1.xpose.msra.mxu0 %v62
  %110 = vmatprep.subr.mxu0 0.0
  %111 = vmatpush1.xpose.msra.mxu0 %v65
  %112 = vmatprep.subr.mxu0 0.0
  %113 = vmatpush1.xpose.msra.mxu0 %v68
  %114 = vmatprep.subr.mxu0 0.0
  %115 = vmatpush1.xpose.msra.mxu0 %v71
  %116 = vmatprep.subr.mxu0 0.0
  %117 = vmatpush1.xpose.msra.mxu0 %v74
  %118 = vmatprep.subr.mxu0 0.0
  %119 = vmatpush1.xpose.msra.mxu0 %v77
  %120 = vmatprep.subr.mxu0 0.0
  %121 = vmatpush1.xpose.msra.mxu0 %v80
  %122 = vmatprep.subr.mxu0 0.0
  %123 = vmatpush1.xpose.msra.mxu0 %v83
  %124 = vmatprep.subr.mxu0 0.0
  %125 = vmatpush1.xpose.msra.mxu0 %v86
  %126 = vmatprep.subr.mxu0 0.0
  %127 = vmatpush1.xpose.msra.mxu0 %v89
  %128 = vmatprep.subr.mxu0 0.0
  %129 = vmatpush1.xpose.msra.mxu0 %v92
  %130 = vmatprep.subr.mxu0 0.0
  %131 = vmatpush1.xpose.msra.mxu0 %v95
  %132 = vmatprep.subr.mxu0 0.0
  %133 = vmatpush1.xpose.msra.mxu0 %v98
  %134 = vmatprep.subr.mxu0 0.0
  %135 = vmatpush1.xpose.msra.mxu0 %v101
  %136 = vmatprep.subr.mxu0 0.0
  %137 = vmatpush1.xpose.msra.mxu0 %v104
  %138 = vmatprep.subr.mxu0 0.0
  %139 = vmatpush1.xpose.msra.mxu0 0.0
  %140 = vmatprep.subr.mxu0 0.0
  %141 = vmatpush1.xpose.msra.mxu0 0.0
  %142 = vmatprep.subr.mxu0 0.0
  %143 = vmatpush1.xpose.msra.mxu0 0.0
  %144 = vmatprep.subr.mxu0 0.0
  %145 = vmatpush1.xpose.msra.mxu0 0.0
  %146 = vmatprep.subr.mxu0 0.0
  %147 = vmatpush1.xpose.msra.mxu0 0.0
  %148 = vmatprep.subr.mxu0 0.0
  %149 = vmatpush1.xpose.msra.mxu0 0.0
  %150 = vmatprep.subr.mxu0 0.0
  %151 = vmatpush1.xpose.msra.mxu0 0.0
  %152 = vmatprep.subr.mxu0 0.0
  %153 = vmatpush1.xpose.msra.mxu0 0.0
  %154 = vmatprep.subr.mxu0 0.0
  %155 = vmatpush1.xpose.msra.mxu0 0.0
  %156 = vmatprep.subr.mxu0 0.0
  %157 = vmatpush1.xpose.msra.mxu0 0.0
  %158 = vmatprep.subr.mxu0 0.0
  %159 = vmatpush1.xpose.msra.mxu0 0.0
  %160 = vmatprep.subr.mxu0 0.0
  %161 = vmatpush1.xpose.msra.mxu0 0.0
  %162 = vmatprep.subr.mxu0 0.0
  %163 = vmatpush1.xpose.msra.mxu0 0.0
  %164 = vmatprep.subr.mxu0 0.0
  %165 = vmatpush1.xpose.msra.mxu0 0.0
  %166 = vmatprep.subr.mxu0 0.0
  %167 = vmatpush1.xpose.msra.mxu0 0.0
  %168 = vmatprep.subr.mxu0 0.0
  %169 = vmatpush1.xpose.msra.mxu0 0.0
  %170 = vmatprep.mubr.f32.mxu0 0.0
  %171 = vmatmul.mubr.f32.gmra.mrb[0].mxu0 %v53
  %v172 = vpop.f32.mrb[0].mxu0
  %v173 = vadd.f32 0.0, %v172
  %v174 = vpop.f32.mrb[0].mxu0
  %175 = vmatprep.mubr.f32.mxu0 0.0
  %176 = vmatmul.mubr.f32.gmra.mrb[0].mxu0 %v56
  %v177 = vpop.f32.mrb[0].mxu0
  %v178 = vadd.f32 0.0, %v177
  %v179 = vpop.f32.mrb[0].mxu0
  %180 = vdwg.mxu0
  %v181 = vld [vmem:[%s2] sm:$0xff]
  %v182 = vld [vmem:[%s2 + $0x8] sm:$0xff]
  %v183 = vld [vmem:[%s3] sm:$0x7]
  %184 = vset.pattern.permute.xlu0 0
  %185 = vperm.xlu0 %184, %v181
  %v186 = vpop.permute.xlu0 %185
  %187 = vset.pattern.permute.xlu0 0
  %188 = vperm.xlu0 %187, %v182
  %v189 = vpop.permute.xlu0 %188
  %v190 = vlaneseq
  %v191 = vshrl.u32 %v190, 7
  %v192 = vsub.s32 0, %v191
  %v193 = vrot.slane %v183, %v192
  %vm194 = vcmp.eq.s32.totalorder %v186, %v193
  %vm195 = vcmp.eq.s32.totalorder %v189, %v193
  %v196 = vsel %vm194, 1, 0
  %v197 = vsel %vm195, 1, 0
  %v198 = vcvt.s32.f32 %v196
  %v199 = vcvt.s32.f32 %v197
  %200 = vset.pattern.permute.xlu0 1
  %201 = vperm.xlu0 %200, %v181
  %v202 = vpop.permute.xlu0 %201
  %203 = vset.pattern.permute.xlu0 1
  %204 = vperm.xlu0 %203, %v182
  %v205 = vpop.permute.xlu0 %204
  %v206 = vlaneseq
  %v207 = vshrl.u32 %v206, 7
  %v208 = vsub.s32 1, %v207
  %v209 = vrot.slane %v183, %v208
  %vm210 = vcmp.eq.s32.totalorder %v202, %v209
  %vm211 = vcmp.eq.s32.totalorder %v205, %v209
  %v212 = vsel %vm210, 1, 0
  %v213 = vsel %vm211, 1, 0
  %v214 = vcvt.s32.f32 %v212
  %v215 = vcvt.s32.f32 %v213
  %v216 = vadd.f32 %v198, %v214
  %v217 = vadd.f32 %v199, %v215
  %218 = vset.pattern.permute.xlu0 2
  %219 = vperm.xlu0 %218, %v181
  %v220 = vpop.permute.xlu0 %219
  %221 = vset.pattern.permute.xlu0 2
  %222 = vperm.xlu0 %221, %v182
  %v223 = vpop.permute.xlu0 %222
  %v224 = vlaneseq
  %v225 = vshrl.u32 %v224, 7
  %v226 = vsub.s32 2, %v225
  %v227 = vrot.slane %v183, %v226
  %vm228 = vcmp.eq.s32.totalorder %v220, %v227
  %vm229 = vcmp.eq.s32.totalorder %v223, %v227
  %v230 = vsel %vm228, 1, 0
  %v231 = vsel %vm229, 1, 0
  %v232 = vcvt.s32.f32 %v230
  %v233 = vcvt.s32.f32 %v231
  %v234 = vadd.f32 %v216, %v232
  %v235 = vadd.f32 %v217, %v233
  %v236 = vmul.f32 %v234, 0.33333334
  %v237 = vmul.f32 %v235, 0.33333334
  %v238 = vld [vmem:[#allocation4] sm:$0xff]
  %v239 = vld [vmem:[#allocation4 + $0x8] sm:$0xff]
  %v240 = vmul.f32 %v236, %v173
  %v241 = vmul.f32 %v237, %v178
  %242 = vadd.xlane.f32.xlu0 %v240
  %v243 = vpop.xlane.xlu0 %242
  %244 = vadd.xlane.f32.xlu0 %v241
  %v245 = vpop.xlane.xlu0 %244
  %v246 = vadd.f32 %v238, %v243
  %v247 = vadd.f32 %v239, %v245
  %vm248 = vcmask 7168
  %249 = vst.msk [vmem:[#allocation4] sm:$0xff] %vm248, %v246
  %250 = vst.msk [vmem:[#allocation4 + $0x8] sm:$0xff] %vm248, %v247
  %v251 = vld [vmem:[#allocation2] sm:$0xff]
  %v252 = vld [vmem:[#allocation2 + $0x8] sm:$0xff]
  %253 = vmax.xlane.f32.xlu0 %v173
  %v254 = vpop.xlane.xlu0 %253
  %255 = vmax.xlane.f32.xlu0 %v178
  %v256 = vpop.xlane.xlu0 %255
  %v257 = vmax.f32 %v251, %v254
  %v258 = vmax.f32 %v252, %v256
  %v259 = vsub.f32 %v251, %v257
  %v260 = vsub.f32 %v252, %v258
  %v261 = vmul.f32 %v259, 1.442695
  %v262 = vpow.pop %v261
  %v263 = vmul.f32 %v260, 1.442695
  %v264 = vpow.pop %v263
  %266 = vset.pattern.permute.xlu0 0
  %267 = vperm.xlu0 %266, %v257
  %v268 = vpop.permute.xlu0 %267
  %271 = vset.pattern.permute.xlu0 0
  %272 = vperm.xlu0 %271, %v258
  %v273 = vpop.permute.xlu0 %272
  %v275 = vsub.f32 %v173, %v268
  %v276 = vsub.f32 %v178, %v273
  %v277 = vmul.f32 %v275, 1.442695
  %v278 = vpow.pop %v277
  %v279 = vmul.f32 %v276, 1.442695
  %v280 = vpow.pop %v279
  %v281 = vld [vmem:[#allocation3] sm:$0xff]
  %v282 = vld [vmem:[#allocation3 + $0x8] sm:$0xff]
  %v283 = vmul.f32 %v262, %v281
  %v284 = vmul.f32 %v264, %v282
  %285 = vadd.xlane.f32.xlu0 %v278
  %v286 = vpop.xlane.xlu0 %285
  %287 = vadd.xlane.f32.xlu0 %v280
  %v288 = vpop.xlane.xlu0 %287
  %v289 = vadd.f32 %v283, %v286
  %v290 = vadd.f32 %v284, %v288
  %291 = vst.msk [vmem:[#allocation3] sm:$0xff] %vm248, %v289
  %292 = vst.msk [vmem:[#allocation3 + $0x8] sm:$0xff] %vm248, %v290
  %293 = vst.msk [vmem:[#allocation2] sm:$0xff] %vm248, %v257
  %294 = vst.msk [vmem:[#allocation2 + $0x8] sm:$0xff] %vm248, %v258
  %s295 = ssub.s32 %s20, %s21
  %p296 = scmp.gt.s32.totalorder %s295, 4294967168
  %p297 = scmp.lt.s32.totalorder %s295, 16
  %p298 = pnand %p296, %p297
  %p299 = pneg %p298
  // Predicated region
  $region26: #{tpu_custom_call.1} parent=0 // pred_check
    _
  $region27: #{tpu_custom_call.1} parent=0 // pred_check_branch
    %301 = sbr.rel (%p298) target = $region29
  $region28: #{tpu_custom_call.1} parent=0 // pred_region
    %v302 = vlaneseq
    %v303 = vshrl.u32 %v302, 7
    %v304 = vadd.s32 %v303, 8
    %v305 = vlaneseq
    %v306 = vand.u32 %v305, 127
    %v307 = vsub.s32 %v306, %v303
    %v308 = vsub.s32 %v306, %v304
    %v309 = vstv %s295
    %vm310 = vcmp.eq.s32.totalorder %v307, %v309
    %vm311 = vcmp.eq.s32.totalorder %v308, %v309
    %v312 = vsel %vm310, %v173, 0.0
    %v313 = vsel %vm311, %v178, 0.0
    %314 = vadd.xlane.f32.xlu0 %v312
    %v315 = vpop.xlane.xlu0 %314
    %316 = vadd.xlane.f32.xlu0 %v313
    %v317 = vpop.xlane.xlu0 %316
    %v318 = vstv %s20
    %v319 = vadd.s32 %v303, %v318
    %v320 = vadd.s32 %v304, %v318
    %v321 = vstv %s21
    %vm322 = vcmp.ge.s32.totalorder %v319, %v321
    %vm323 = vcmp.ge.s32.totalorder %v320, %v321
    %s324 = sadd.s32 %s21, 128
    %v325 = vstv %s324
    %vm326 = vcmp.lt.s32.totalorder %v319, %v325
    %vm327 = vcmp.lt.s32.totalorder %v320, %v325
    %vm328 = vmand %vm322, %vm326
    %vm329 = vmand %vm323, %vm327
    %v330 = vld [vmem:[#allocation2] sm:$0xff]
    %v331 = vld [vmem:[#allocation2 + $0x8] sm:$0xff]
    %v332 = vld [vmem:[#allocation3] sm:$0xff]
    %v333 = vld [vmem:[#allocation3 + $0x8] sm:$0xff]
    %v334 = vsub.f32 %v315, %v330
    %v335 = vsub.f32 %v317, %v331
    %v336 = vmul.f32 %v334, 1.442695
    %v337 = vpow.pop %v336
    %v338 = vmul.f32 %v335, 1.442695
    %v339 = vpow.pop %v338
    %v340 = vsel %vm328, %v337, 0.0
    %v341 = vsel %vm329, %v339, 0.0
    %v342 = vsub.f32 %v332, %v340
    %v343 = vsub.f32 %v333, %v341
    %344 = vst.msk [vmem:[#allocation3] sm:$0xff] %vm248, %v342
    %345 = vst.msk [vmem:[#allocation3 + $0x8] sm:$0xff] %vm248, %v343
    %v346 = vld [vmem:[#allocation4] sm:$0xff]
    %v347 = vld [vmem:[#allocation4 + $0x8] sm:$0xff]
    %v348 = vsel %vm328, %v315, 0.0
    %v349 = vsel %vm329, %v317, 0.0
    %v350 = vsub.f32 %v346, %v348
    %v351 = vsub.f32 %v347, %v349
    %352 = vst.msk [vmem:[#allocation4] sm:$0xff] %vm248, %v350
    %353 = vst.msk [vmem:[#allocation4 + $0x8] sm:$0xff] %vm248, %v351
  $region29: #{tpu_custom_call.1} parent=0 // pred_fallthru
    _
  // Predicated region
  $region30: #{tpu_custom_call.1} parent=0 // pred_check
    %p354 = pneg %p22
  $region31: #{tpu_custom_call.1} parent=0 // pred_check_branch
    %356 = sbr.rel (%p354) target = $region33
  $region32: #{tpu_custom_call.1} parent=0 // pred_region
    %v357 = vld [vmem:[#allocation3] sm:$0xff]
    %v358 = vld [vmem:[#allocation3 + $0x8] sm:$0xff]
    %v359 = vld [vmem:[#allocation2] sm:$0xff]
    %v360 = vld [vmem:[#allocation2 + $0x8] sm:$0xff]
    %v361 = vsub.f32 0.0, %v359
    %v362 = vsub.f32 0.0, %v360
    %v363 = vmul.f32 %v361, 1.442695
    %v364 = vpow.pop %v363
    %v365 = vmul.f32 %v362, 1.442695
    %v366 = vpow.pop %v365
    %v367 = vmul.f32 %v364, 112.0
    %v368 = vmul.f32 %v366, 112.0
    %v369 = vsub.f32 %v357, %v367
    %v370 = vsub.f32 %v358, %v368
    %371 = vst.msk [vmem:[#allocation3] sm:$0xff] %vm248, %v369
    %372 = vst.msk [vmem:[#allocation3 + $0x8] sm:$0xff] %vm248, %v370
    %v373 = vld [vmem:[#allocation2] sm:$0xff]
    %v374 = vld [vmem:[#allocation2 + $0x8] sm:$0xff]
    %v375 = vld [vmem:[#allocation3] sm:$0xff]
    %v376 = vld [vmem:[#allocation3 + $0x8] sm:$0xff]
    %v377 = vlog2.pop %v375
    %v378 = vmul.f32 %v377, 0.6931472
    %v379 = vlog2.pop %v376
    %v380 = vmul.f32 %v379, 0.6931472
    %v381 = vadd.f32 %v373, %v378
    %v382 = vadd.f32 %v374, %v380
    %v383 = vld [vmem:[#allocation4] sm:$0xff]
    %v384 = vld [vmem:[#allocation4 + $0x8] sm:$0xff]
    %v385 = vld [vmem:[%s4] sm:$0xff]
    %v386 = vld [vmem:[%s4 + $0x8] sm:$0xff]
    %v387 = vrcp.pop %v385
    %v388 = vmul.f32 %v383, %v387
    %v389 = vrcp.pop %v386
    %v390 = vmul.f32 %v384, %v389
    %v391 = vsub.f32 %v388, %v381
    %v392 = vsub.f32 %v390, %v382
    %v393 = vmul.f32 %v391, -0.2
    %v394 = vmul.f32 %v392, -0.2
    %395 = vst.msk [vmem:[%s5] sm:$0xff] %vm248, %v393
    %396 = vst.msk [vmem:[%s5 + $0x8] sm:$0xff] %vm248, %v394
  $region33: #{tpu_custom_call.1} parent=0 // pred_fallthru
    _
  // Predicated region
  $region34: #{tpu_custom_call.1} parent=0 // pred_check
    _
  $region35: #{tpu_custom_call.1} parent=0 // pred_check_branch
    %398 = sbr.rel (0) target = $region37
  $region36: #{tpu_custom_call.1} parent=0 // pred_region
    _
  $region37: #{tpu_custom_call.1} parent=0 // pred_fallthru
    _
  // Predicated region
  $region38: #{tpu_custom_call.1} parent=0 // pred_check
    _
  $region39: #{tpu_custom_call.1} parent=0 // pred_check_branch
    %400 = sbr.rel (0) target = $region41
  $region40: #{tpu_custom_call.1} parent=0 // pred_region
    _
  $region41: #{tpu_custom_call.1} parent=0 // pred_fallthru
    _

</llo_original>
